<compile_context>
chip_gen: v6e
topology: v6e:2x2x1
jax: 0.10.0
libtpu: 0.0.40
codegen_flags: <defaults>
</compile_context>

<pallas_src>
import jax
import jax.numpy as jnp
from jax.experimental import pallas as pl
from jax.experimental.pallas import tpu as pltpu


def _rdrop_kernel(kw_ref, l1_ref, l2_ref, tgt_ref, out_ref):
    """Per-row R-Drop loss for one (tn, C) tile.

    kw_ref : (1,)    f32 SMEM -- kl_weight scalar
    l1_ref : (tn, C) VMEM     -- logits1 tile (f32 or bf16)
    l2_ref : (tn, C) VMEM     -- logits2 tile
    tgt_ref: (tn, 1) i32 VMEM -- target class index per row
    out_ref: (tn, 1) f32 VMEM -- per-row loss
    """
    l1 = l1_ref[...].astype(jnp.float32)
    l2 = l2_ref[...].astype(jnp.float32)
    kw = kw_ref[0]

    def softmax_stats(x):
        # One exp pass per stream, reused for both log-softmax and softmax.
        m = jnp.max(x, axis=-1, keepdims=True)
        e = jnp.exp(x - m)
        s = jnp.sum(e, axis=-1, keepdims=True)
        logp = (x - m) - jnp.log(s)
        p = e * pl.reciprocal(s, approx=True)
        return logp, p

    logp1, p1 = softmax_stats(l1)
    logp2, p2 = softmax_stats(l2)

    # CE: 0.5*(ce1 + ce2) = -0.5 * (logp1 + logp2)[target], gathered via an
    # in-kernel iota mask (no one-hot streamed from HBM).
    cls = jax.lax.broadcasted_iota(jnp.int32, l1.shape, 1)
    picked = jnp.where(cls == tgt_ref[...], logp1 + logp2, 0.0)
    ce = -0.5 * jnp.sum(picked, axis=-1, keepdims=True)

    # Symmetric KL: 0.5*(KL(p2||p1) + KL(p1||p2)) = 0.5*sum((p1-p2)*(logp1-logp2))
    kl = 0.5 * jnp.sum((p1 - p2) * (logp1 - logp2), axis=-1, keepdims=True)

    out_ref[...] = ce + kw * kl


def _round_up(x, m):
    return (x + m - 1) // m * m


def _pick_tn(n, c):
    # ~12 live [tn, C] f32-sized copies: 2 double-buffered VMEM blocks for each
    # of the two logits streams (4) plus in-kernel f32 temporaries (~8).
    # Keep them within a ~24 MiB tile budget (fits v5e/v6e/v7x once
    # vmem_limit_bytes=48 MiB is requested).
    budget = 24 << 20
    tn = budget // (12 * 4 * c)
    return max(8, min(1024, (tn // 8) * 8))


def rdrop_loss(logits1, logits2, target, kl_weight=1.0, reduction='mean',
               tn=None, vmem_limit_bytes=48 << 20):
    n, c = logits1.shape
    assert logits2.shape == (n, c) and target.shape == (n,)

    # Note: for C < 128 (like the demo's C=32) only part of each vreg's lanes
    # is active; real workloads with tiny C could fold rows into the lane dim.
    if tn is None:
        tn = _pick_tn(n, c)
    if tn >= n:
        tn = _round_up(n, 8)            # single tile covering the whole batch
    else:
        tn = max(8, (tn // 8) * 8)
    n_pad = _round_up(n, tn)

    if n_pad != n:
        pad = n_pad - n
        logits1 = jnp.pad(logits1, ((0, pad), (0, 0)))
        logits2 = jnp.pad(logits2, ((0, pad), (0, 0)))
        target = jnp.pad(target, (0, pad))

    tgt_col = target.astype(jnp.int32).reshape(n_pad, 1)
    kw = jnp.asarray([kl_weight], dtype=jnp.float32)

    row_spec = pl.BlockSpec((tn, c), lambda i: (i, 0))
    out = pl.pallas_call(
        _rdrop_kernel,
        out_shape=jax.ShapeDtypeStruct((n_pad, 1), jnp.float32),
        grid_spec=pltpu.PrefetchScalarGridSpec(
            num_scalar_prefetch=0,
            grid=(n_pad // tn,),
            in_specs=[
                pl.BlockSpec(memory_space=pltpu.MemorySpace.SMEM),  # kl_weight
                row_spec,                                           # logits1
                row_spec,                                           # logits2
                pl.BlockSpec((tn, 1), lambda i: (i, 0)),            # target
            ],
            out_specs=pl.BlockSpec((tn, 1), lambda i: (i, 0)),
        ),
        compiler_params=pltpu.CompilerParams(
            dimension_semantics=("parallel",),
            vmem_limit_bytes=vmem_limit_bytes),
    )(kw, logits1, logits2, tgt_col)

    row_loss = out[:n, 0]            # drop padded rows; keep f32
    if reduction == 'mean':
        return jnp.mean(row_loss)
    if reduction == 'sum':
        return jnp.sum(row_loss)
    return row_loss


def _rdrop_reference(logits1, logits2, target, kl_weight=1.0, reduction='mean'):
    logits1 = logits1.astype(jnp.float32)
    logits2 = logits2.astype(jnp.float32)
    logp1 = jax.nn.log_softmax(logits1, axis=-1)
    logp2 = jax.nn.log_softmax(logits2, axis=-1)
    p1, p2 = jnp.exp(logp1), jnp.exp(logp2)
    oh = jax.nn.one_hot(target, logits1.shape[-1], dtype=jnp.float32)
    ce = 0.5 * (-jnp.sum(oh * logp1, -1) - jnp.sum(oh * logp2, -1))
    kl = 0.5 * (jnp.sum(p2 * (logp2 - logp1), -1) + jnp.sum(p1 * (logp1 - logp2), -1))
    loss = ce + kl_weight * kl
    if reduction == 'mean':
        return loss.mean()
    if reduction == 'sum':
        return loss.sum()
    return loss


if __name__ == "__main__":
    key = jax.random.PRNGKey(0)
    k1, k2, k3 = jax.random.split(key, 3)

    N, C = 8, 32
    logits1 = jax.random.normal(k1, (N, C), dtype=jnp.float32)
    logits2 = jax.random.normal(k2, (N, C), dtype=jnp.float32)
    target = jax.random.randint(k3, (N,), 0, C, dtype=jnp.int32)

    # all three reductions
    for reduction in ('mean', 'sum', 'none'):
        out = jax.block_until_ready(
            rdrop_loss(logits1, logits2, target, kl_weight=1.0,
                       reduction=reduction))
        ref = _rdrop_reference(logits1, logits2, target, 1.0, reduction)
        assert jnp.allclose(out, ref, atol=5e-3, rtol=5e-3), (reduction, out, ref)

    # ragged batch (N=6 -> padded to a tile of 8 in the wrapper)
    out = jax.block_until_ready(
        rdrop_loss(logits1[:6], logits2[:6], target[:6], kl_weight=0.5,
                   reduction='mean'))
    ref = _rdrop_reference(logits1[:6], logits2[:6], target[:6], 0.5, 'mean')
    assert jnp.allclose(out, ref, atol=5e-3, rtol=5e-3), (out, ref)

    # bf16 logits accepted without wrapper upcast (kernel computes in f32)
    out = jax.block_until_ready(
        rdrop_loss(logits1.astype(jnp.bfloat16), logits2.astype(jnp.bfloat16),
                   target, reduction='mean'))
    ref = _rdrop_reference(logits1.astype(jnp.bfloat16),
                           logits2.astype(jnp.bfloat16), target, 1.0, 'mean')
    assert jnp.allclose(out, ref, atol=2e-2, rtol=2e-2), (out, ref)

    print("KERNEL_OK")
</pallas_src>

<mosaic_0001>
module attributes {stable_mosaic.version = 11 : i64} {
  func.func @_rdrop_kernel(%arg0: i32, %arg1: memref<1xf32, #tpu.memory_space<smem>>, %arg2: memref<8x32xf32, #tpu.memory_space<vmem>>, %arg3: memref<8x32xf32, #tpu.memory_space<vmem>>, %arg4: memref<8x1xi32, #tpu.memory_space<vmem>>, %arg5: memref<8x1xf32, #tpu.memory_space<vmem>>) attributes {dimension_semantics = [#tpu.dimension_semantics<parallel>], iteration_bounds = array<i64: 1>, scalar_prefetch = 0 : i64, scratch_operands = 0 : i64, tpu.core_type = #tpu.core_type<tc>, window_params = [{transform_indices = @transform_0, window_bounds = array<i64: 1>}, {transform_indices = @transform_1, window_bounds = array<i64: 8, 32>}, {transform_indices = @transform_2, window_bounds = array<i64: 8, 32>}, {transform_indices = @transform_3, window_bounds = array<i64: 8, 1>}, {transform_indices = @transform_4, window_bounds = array<i64: 8, 1>}]} {
    %c0 = arith.constant 0 : index
    %c0_0 = arith.constant 0 : index
    %0 = vector.load %arg2[%c0, %c0_0] : memref<8x32xf32, #tpu.memory_space<vmem>>, vector<8x32xf32>
    %c0_1 = arith.constant 0 : index
    %c0_2 = arith.constant 0 : index
    %1 = vector.load %arg3[%c0_1, %c0_2] : memref<8x32xf32, #tpu.memory_space<vmem>>, vector<8x32xf32>
    %c0_3 = arith.constant 0 : index
    %2 = memref.load %arg1[%c0_3] : memref<1xf32, #tpu.memory_space<smem>>
    %cst = arith.constant dense<0xFF800000> : vector<8xf32>
    %3 = vector.multi_reduction <maximumf>, %0, %cst [1] : vector<8x32xf32> to vector<8xf32>
    %4 = vector.shape_cast %3 : vector<8xf32> to vector<8x1xf32>
    %5 = vector.broadcast %4 : vector<8x1xf32> to vector<8x32xf32>
    %6 = arith.subf %0, %5 : vector<8x32xf32>
    %7 = math.exp %6 : vector<8x32xf32>
    %cst_4 = arith.constant dense<0.000000e+00> : vector<8xf32>
    %8 = vector.multi_reduction <add>, %7, %cst_4 [1] : vector<8x32xf32> to vector<8xf32>
    %9 = vector.shape_cast %8 : vector<8xf32> to vector<8x1xf32>
    %10 = vector.broadcast %4 : vector<8x1xf32> to vector<8x32xf32>
    %11 = arith.subf %0, %10 : vector<8x32xf32>
    %12 = math.log %9 : vector<8x1xf32>
    %13 = vector.broadcast %12 : vector<8x1xf32> to vector<8x32xf32>
    %14 = arith.subf %11, %13 : vector<8x32xf32>
    %15 = tpu.reciprocal %9 {approx = true} : vector<8x1xf32> -> vector<8x1xf32>
    %16 = vector.broadcast %15 : vector<8x1xf32> to vector<8x32xf32>
    %17 = arith.mulf %7, %16 : vector<8x32xf32>
    %cst_5 = arith.constant dense<0xFF800000> : vector<8xf32>
    %18 = vector.multi_reduction <maximumf>, %1, %cst_5 [1] : vector<8x32xf32> to vector<8xf32>
    %19 = vector.shape_cast %18 : vector<8xf32> to vector<8x1xf32>
    %20 = vector.broadcast %19 : vector<8x1xf32> to vector<8x32xf32>
    %21 = arith.subf %1, %20 : vector<8x32xf32>
    %22 = math.exp %21 : vector<8x32xf32>
    %cst_6 = arith.constant dense<0.000000e+00> : vector<8xf32>
    %23 = vector.multi_reduction <add>, %22, %cst_6 [1] : vector<8x32xf32> to vector<8xf32>
    %24 = vector.shape_cast %23 : vector<8xf32> to vector<8x1xf32>
    %25 = vector.broadcast %19 : vector<8x1xf32> to vector<8x32xf32>
    %26 = arith.subf %1, %25 : vector<8x32xf32>
    %27 = math.log %24 : vector<8x1xf32>
    %28 = vector.broadcast %27 : vector<8x1xf32> to vector<8x32xf32>
    %29 = arith.subf %26, %28 : vector<8x32xf32>
    %30 = tpu.reciprocal %24 {approx = true} : vector<8x1xf32> -> vector<8x1xf32>
    %31 = vector.broadcast %30 : vector<8x1xf32> to vector<8x32xf32>
    %32 = arith.mulf %22, %31 : vector<8x32xf32>
    %33 = tpu.iota {dimensions = array<i32: 1>} : vector<8x32xi32>
    %c0_7 = arith.constant 0 : index
    %c0_8 = arith.constant 0 : index
    %34 = vector.load %arg4[%c0_7, %c0_8] : memref<8x1xi32, #tpu.memory_space<vmem>>, vector<8x1xi32>
    %35 = vector.broadcast %34 : vector<8x1xi32> to vector<8x32xi32>
    %36 = arith.cmpi eq, %33, %35 : vector<8x32xi32>
    %37 = arith.addf %14, %29 : vector<8x32xf32>
    %cst_9 = arith.constant 0.000000e+00 : f32
    %38 = vector.broadcast %cst_9 : f32 to vector<8x32xf32>
    %39 = arith.select %36, %37, %38 : vector<8x32xi1>, vector<8x32xf32>
    %cst_10 = arith.constant dense<0.000000e+00> : vector<8xf32>
    %40 = vector.multi_reduction <add>, %39, %cst_10 [1] : vector<8x32xf32> to vector<8xf32>
    %41 = vector.shape_cast %40 : vector<8xf32> to vector<8x1xf32>
    %cst_11 = arith.constant -5.000000e-01 : f32
    %42 = vector.broadcast %cst_11 : f32 to vector<8x1xf32>
    %43 = arith.mulf %42, %41 : vector<8x1xf32>
    %44 = arith.subf %17, %32 : vector<8x32xf32>
    %45 = arith.subf %14, %29 : vector<8x32xf32>
    %46 = arith.mulf %44, %45 : vector<8x32xf32>
    %cst_12 = arith.constant dense<0.000000e+00> : vector<8xf32>
    %47 = vector.multi_reduction <add>, %46, %cst_12 [1] : vector<8x32xf32> to vector<8xf32>
    %48 = vector.shape_cast %47 : vector<8xf32> to vector<8x1xf32>
    %cst_13 = arith.constant 5.000000e-01 : f32
    %49 = vector.broadcast %cst_13 : f32 to vector<8x1xf32>
    %50 = arith.mulf %49, %48 : vector<8x1xf32>
    %51 = vector.broadcast %2 : f32 to vector<8x1xf32>
    %52 = arith.mulf %51, %50 : vector<8x1xf32>
    %53 = arith.addf %43, %52 : vector<8x1xf32>
    %c0_14 = arith.constant 0 : index
    %c0_15 = arith.constant 0 : index
    %54 = vector.load %arg5[%c0_14, %c0_15] : memref<8x1xf32, #tpu.memory_space<vmem>>, vector<8x1xf32>
    tpu.vector_store %arg5[%c0_14, %c0_15], %53 {strides = array<i32>} : memref<8x1xf32, #tpu.memory_space<vmem>>, vector<8x1xf32>,
    return
  }
  func.func @transform_0(%arg0: i32) -> i32 {
    %c0_i32 = arith.constant 0 : i32
    %c0_i32_0 = arith.constant 0 : i32
    return %c0_i32 : i32
  }
  func.func @transform_1(%arg0: i32) -> (i32, i32) {
    %c0_i32 = arith.constant 0 : i32
    %c0_i32_0 = arith.constant 0 : i32
    return %arg0, %c0_i32 : i32, i32
  }
  func.func @transform_2(%arg0: i32) -> (i32, i32) {
    %c0_i32 = arith.constant 0 : i32
    %c0_i32_0 = arith.constant 0 : i32
    return %arg0, %c0_i32 : i32, i32
  }
  func.func @transform_3(%arg0: i32) -> (i32, i32) {
    %c0_i32 = arith.constant 0 : i32
    %c0_i32_0 = arith.constant 0 : i32
    return %arg0, %c0_i32 : i32, i32
  }
  func.func @transform_4(%arg0: i32) -> (i32, i32) {
    %c0_i32 = arith.constant 0 : i32
    %c0_i32_0 = arith.constant 0 : i32
    return %arg0, %c0_i32 : i32, i32
  }
}

</mosaic_0001>

<llo_original>
// kernel: tpu_custom_call.1
$region0: #{tpu_custom_call.1}
  #allocation0 [shape = 'u32[]', space=smem, size = 0x4, offset = 0x4, fixed_abs, tag = 'smem constant byte address 0x4 - core index']
  #allocation1 [shape = 'u32[144,128]{1,0:T(1,128)}', space=vmem, size = 0x12000, scoped, tag = 'internal scratch']
  #allocation2 [shape = 'f32[1]{0:T(128)S(6)}', space=smem, size = 0x200, scoped, tag = 'scoped memory for tpu_custom_call.1']
  %s0 = inlined_call_operand.<no memory space> [shape: f32[1], index: 0, kind: input, shape index: {}]
  %s1 = inlined_call_operand.vmem [shape: f32[8,32], index: 1, kind: input, shape index: {}]
  %s2 = inlined_call_operand.hbm [shape: f32[8,32], index: 2, kind: input, shape index: {}]
  %s3 = inlined_call_operand.vmem [shape: s32[8,1], index: 3, kind: input, shape index: {}]
  %s4 = inlined_call_operand.vmem [shape: f32[8,1], index: 4, kind: output, shape index: {}]
  %s5 = sld [smem:[#allocation0]]
  $region30: #{tpu_custom_call.1} parent=0
    _
  %s7 = ssub.s32 1, %s5
  %s8 = scalar_select 0, %s7, %s5
  %9 = sst [smem:[#allocation2]] %s0
  $region1: #{tpu_custom_call.1} parent=0
    #allocation3 [shape = 'u8[4096]{0}', space=vmem, size = 0x1000, scoped, tag = 'input window, operand 2, single buffered']
    #allocation4 [shape = 's32[1]{0}', space=sflag, size = 0x4, scoped, tag = 'scoped memory for tpu_custom_call.1']
    %10 = vsyncpa [#allocation4], 0
    // Predicated region
    $region2: #{tpu_custom_call.1} parent=1 // pred_check
      _
    $region3: #{tpu_custom_call.1} parent=1 // pred_check_branch
      %12 = sbr.rel (0) target = $region5
    $region4: #{tpu_custom_call.1} parent=1 // pred_region
      _
    $region5: #{tpu_custom_call.1} parent=1 // pred_fallthru
      _
    // Predicated region
    $region6: #{tpu_custom_call.1} parent=1 // pred_check
      _
    $region7: #{tpu_custom_call.1} parent=1 // pred_check_branch
      %14 = sbr.rel (0) target = $region9
    $region8: #{tpu_custom_call.1} parent=1 // pred_region
      _
    $region9: #{tpu_custom_call.1} parent=1 // pred_fallthru
      _
    // Predicated region
    $region10: #{tpu_custom_call.1} parent=1 // pred_check
      _
    $region11: #{tpu_custom_call.1} parent=1 // pred_check_branch
      %16 = sbr.rel (0) target = $region13
    $region12: #{tpu_custom_call.1} parent=1 // pred_region
      %s18 = ssub.s32 128, 128
      %19 = vsyncadd [#allocation4], %s18
      %s21 = sshll.u32 [#allocation3], 4
      %s22 = int_to_ptr.vmem [resolvable:$true] %s21
      %24 = dma.hbm_to_vmem [thread:$0]  %s2, 128, %s22, [#allocation4]
    $region13: #{tpu_custom_call.1} parent=1 // pred_fallthru
      _
    // Predicated region
    $region14: #{tpu_custom_call.1} parent=1 // pred_check
      _
    $region15: #{tpu_custom_call.1} parent=1 // pred_check_branch
      %26 = sbr.rel (0) target = $region17
    $region16: #{tpu_custom_call.1} parent=1 // pred_region
      _
    $region17: #{tpu_custom_call.1} parent=1 // pred_fallthru
      _
    // Predicated region
    $region18: #{tpu_custom_call.1} parent=1 // pred_check
      _
    $region19: #{tpu_custom_call.1} parent=1 // pred_check_branch
      %28 = sbr.rel (0) target = $region21
    $region20: #{tpu_custom_call.1} parent=1 // pred_region
      %29 = dma.done [#allocation4], 128
    $region21: #{tpu_custom_call.1} parent=1 // pred_fallthru
      _
    %v30 = vld [vmem:[%s1] sm:$0xff]
    %v31 = vld [vmem:[#allocation3] sm:$0xff]
    %s32 = sld [smem:[#allocation2]]
    %vm33 = vcmask 261120
    %v34 = vsel %vm33, %v30, -inf
    %35 = vmax.xlane.f32.xlu0 %v34
    %v36 = vpop.xlane.xlu0 %35
    %v37 = vsub.f32 %v30, %v36
    %v38 = vmul.f32 %v37, 1.442695
    %v39 = vpow.pop %v38
    %v40 = vsel %vm33, %v39, 0.0
    %41 = vadd.xlane.f32.xlu0 %v40
    %v42 = vpop.xlane.xlu0 %41
    %v43 = vlog2.pop %v42
    %v44 = vmul.f32 %v43, 0.6931472
    %v45 = vsub.f32 %v37, %v44
    %v46 = vrcp.pop %v42
    %v47 = vmul.f32 %v39, %v46
    %v48 = vsel %vm33, %v31, -inf
    %49 = vmax.xlane.f32.xlu0 %v48
    %v50 = vpop.xlane.xlu0 %49
    %v51 = vsub.f32 %v31, %v50
    %v52 = vmul.f32 %v51, 1.442695
    %v53 = vpow.pop %v52
    %v54 = vsel %vm33, %v53, 0.0
    %55 = vadd.xlane.f32.xlu0 %v54
    %v56 = vpop.xlane.xlu0 %55
    %v57 = vlog2.pop %v56
    %v58 = vmul.f32 %v57, 0.6931472
    %v59 = vsub.f32 %v51, %v58
    %v60 = vrcp.pop %v56
    %v61 = vmul.f32 %v53, %v60
    %v62 = vlaneseq
    %v63 = vand.u32 %v62, 127
    %v64 = vld [vmem:[%s3] sm:$0xff]
    %65 = vset.pattern.permute.xlu0 0
    %66 = vperm.xlu0 %65, %v64
    %v67 = vpop.permute.xlu0 %66
    %vm68 = vcmp.eq.s32.totalorder %v63, %v67
    %v69 = vadd.f32 %v45, %v59
    %v70 = vsel %vm68, %v69, 0.0
    %v71 = vsel %vm33, %v70, 0.0
    %72 = vadd.xlane.f32.xlu0 %v71
    %v73 = vpop.xlane.xlu0 %72
    %v74 = vmul.f32 %v73, -0.5
    %v75 = vsub.f32 %v47, %v61
    %v76 = vsub.f32 %v45, %v59
    %v77 = vmul.f32 %v75, %v76
    %v78 = vsel %vm33, %v77, 0.0
    %79 = vadd.xlane.f32.xlu0 %v78
    %v80 = vpop.xlane.xlu0 %79
    %v81 = vmul.f32 %v80, 0.5
    %v82 = vstv %s32
    %v83 = vmul.f32 %v82, %v81
    %v84 = vadd.f32 %v74, %v83
    %vm85 = vcmask 7168
    %86 = vst.msk [vmem:[%s4] sm:$0xff] %vm85, %v84
    // Predicated region
    $region22: #{tpu_custom_call.1} parent=1 // pred_check
      _
    $region23: #{tpu_custom_call.1} parent=1 // pred_check_branch
      %88 = sbr.rel (0) target = $region25
    $region24: #{tpu_custom_call.1} parent=1 // pred_region
      _
    $region25: #{tpu_custom_call.1} parent=1 // pred_fallthru
      _
    // Predicated region
    $region26: #{tpu_custom_call.1} parent=1 // pred_check
      _
    $region27: #{tpu_custom_call.1} parent=1 // pred_check_branch
      %90 = sbr.rel (0) target = $region29
    $region28: #{tpu_custom_call.1} parent=1 // pred_region
      _
    $region29: #{tpu_custom_call.1} parent=1 // pred_fallthru
      _
    %91 = vsyncpa [#allocation4], 1

</llo_original>
